<compile_context>
chip_gen: v7x
topology: tpu7x:2x2x1
jax: 0.10.0
libtpu: 0.0.40
codegen_flags: <defaults>
</compile_context>

<pallas_src>
import functools

import jax
import jax.numpy as jnp
from jax.experimental import pallas as pl
from jax.experimental.pallas import tpu as pltpu


def _round_up(n, m):
    return ((n + m - 1) // m) * m


def _softplus(x):
    # Numerically-stable softplus (EUP slot); runs in x.dtype (f32 or bf16).
    return jnp.logaddexp(x, 0.0)


def mlp_kernel(x_ref, w1_ref, b1_ref, w2_ref, b2_ref, w3_ref, b3_ref,
               wo_ref, bo_ref, out_ref):
    """Fused 4-layer MLP with softplus.

    Matmuls run in the weights' dtype (f32 or bf16) on the MXU with f32
    accumulation (f32 bias add).  Softplus runs in the compute dtype: f32 for
    the exact path, bf16 when weights were prepared in bf16 (v6e/v7x bf16 EUP).
    """
    cdt = w1_ref.dtype
    h = x_ref[...].astype(cdt)

    h = _softplus((jnp.dot(h, w1_ref[...], preferred_element_type=jnp.float32)
                   + b1_ref[...]).astype(cdt))
    h = _softplus((jnp.dot(h, w2_ref[...], preferred_element_type=jnp.float32)
                   + b2_ref[...]).astype(cdt))
    h = _softplus((jnp.dot(h, w3_ref[...], preferred_element_type=jnp.float32)
                   + b3_ref[...]).astype(cdt))

    logits = jnp.dot(h, wo_ref[...], preferred_element_type=jnp.float32) + bo_ref[...]
    out_ref[...] = logits.astype(out_ref.dtype)   # narrow (tile, O) store


def prepare_params(params, compute_dtype=jnp.float32):
    """One-time parameter prep — call once at init, NOT per forward.

    MXU operands (weights) go to `compute_dtype` (f32, or bf16 on v6e/v7x for
    ~2-4x MXU throughput + half the weight DMA bytes); biases stay f32 since
    they are added to the f32 MXU accumulator.
    """
    w1, b1, w2, b2, w3, b3, wo, bo = params
    cw = lambda w: jnp.asarray(w, compute_dtype)
    cb = lambda b: jnp.asarray(b, jnp.float32)
    return (cw(w1), cb(b1), cw(w2), cb(b2), cw(w3), cb(b3), cw(wo), cb(bo))


def policy_net_forward(x, prepared_params, *, batch_tile=1024):
    """Run the fused MLP kernel.

    x: [B, state_size] float32 -> [B, output_size] float32 logits.
    `prepared_params` must come from `prepare_params` (hoisted weight prep).
    """
    w1, b1, w2, b2, w3, b3, wo, bo = prepared_params
    B, S = x.shape
    H = w1.shape[1]
    O = wo.shape[1]

    weight_bytes = sum(int(a.size) * a.dtype.itemsize for a in prepared_params)
    cost = pl.CostEstimate(
        flops=2 * B * (S * H + 2 * H * H + H * O),
        transcendentals=2 * 3 * B * H,                      # exp + log1p, 3 layers
        bytes_accessed=int(x.size) * x.dtype.itemsize + weight_bytes + B * O * 4,
    )

    args = (x, w1, b1, w2, b2, w3, b3, wo, bo)

    if B <= batch_tile:
        # Latency path (RL inference): single gridless block, whole problem
        # (~150 KB weights + activations) resident in VMEM, no pipelining
        # machinery, no padding.
        return pl.pallas_call(
            mlp_kernel,
            out_shape=jax.ShapeDtypeStruct((B, O), jnp.float32),
            cost_estimate=cost,
        )(*args)

    # Throughput path: tile the batch axis.  Cap the tile so the grid stays
    # >= 2 and roughly balanced (both v7x TensorCores fed); no jnp.pad of x —
    # Pallas clips the ragged last block.
    tile = min(batch_tile, max(256, _round_up(-(-B // 2), 256)))
    grid = (-(-B // tile),)
    rep = lambda a: pl.BlockSpec(a.shape, lambda i: (0, 0))   # VMEM-resident weights

    return pl.pallas_call(
        mlp_kernel,
        out_shape=jax.ShapeDtypeStruct((B, O), jnp.float32),
        grid_spec=pltpu.PrefetchScalarGridSpec(
            num_scalar_prefetch=0,
            grid=grid,
            in_specs=[
                pl.BlockSpec((tile, S), lambda i: (i, 0)),     # x tile
                rep(w1), rep(b1),                              # fc1
                rep(w2), rep(b2),                              # fc2
                rep(w3), rep(b3),                              # fc3
                rep(wo), rep(bo),                              # out (narrow)
            ],
            out_specs=pl.BlockSpec((tile, O), lambda i: (i, 0)),
        ),
        compiler_params=pltpu.CompilerParams(
            # batch axis is independent -> shard across v7x's 2 TensorCores
            dimension_semantics=("parallel",),
            # explicit scoped-VMEM limit so large tiles are safe under the
            # 16 MiB v5e default (usage at tile=2048 f32 is only a few MiB)
            vmem_limit_bytes=32 * 1024 * 1024,
        ),
        cost_estimate=cost,
    )(*args)


def init_params(key, state_size, output_size, hidden=128):
    """Deterministic parameter init (stand-in for BBB posterior means)."""
    ks = jax.random.split(key, 8)

    def lin(kw, kb, fan_in, fan_out):
        scale = 1.0 / jnp.sqrt(fan_in)
        w = jax.random.uniform(kw, (fan_in, fan_out), jnp.float32, -scale, scale)
        b = jax.random.uniform(kb, (1, fan_out), jnp.float32, -scale, scale)
        return w, b

    w1, b1 = lin(ks[0], ks[1], state_size, hidden)
    w2, b2 = lin(ks[2], ks[3], hidden, hidden)
    w3, b3 = lin(ks[4], ks[5], hidden, hidden)
    wo, bo = lin(ks[6], ks[7], hidden, output_size)
    return (w1, b1, w2, b2, w3, b3, wo, bo)


def reference_forward(x, params):
    w1, b1, w2, b2, w3, b3, wo, bo = params
    h = jax.nn.softplus(x @ w1 + b1)
    h = jax.nn.softplus(h @ w2 + b2)
    h = jax.nn.softplus(h @ w3 + b3)
    return h @ wo + bo


if __name__ == "__main__":
    # shapes consistent with the module: state_size=32, output_size=8
    B, STATE, OUT = 8, 32, 8
    key = jax.random.PRNGKey(0)
    kx, kp = jax.random.split(key)
    raw_params = init_params(kp, STATE, OUT)

    # 1) tiny-batch latency path: gridless single block, f32 everywhere (exact)
    params_f32 = prepare_params(raw_params, compute_dtype=jnp.float32)  # hoisted
    fwd_f32 = jax.jit(functools.partial(policy_net_forward, batch_tile=1024))
    x_small = jax.random.normal(kx, (B, STATE), jnp.float32)
    y_small = fwd_f32(x_small, params_f32)
    jax.block_until_ready(y_small)
    ref_small = reference_forward(x_small, raw_params)
    assert y_small.shape == (B, OUT)
    assert jnp.allclose(y_small, ref_small, atol=1e-4, rtol=1e-4), \
        "f32 mismatch vs reference"

    # 2) batch-tiled throughput path: bf16 MXU + bf16 softplus, ragged last tile
    #    (B=384 with tile=256 -> grid of 2, second block clipped to 128 rows).
    params_bf16 = prepare_params(raw_params, compute_dtype=jnp.bfloat16)  # hoisted
    BL = 384
    x_large = jax.random.normal(kx, (BL, STATE), jnp.float32)
    fwd_bf16 = jax.jit(functools.partial(policy_net_forward, batch_tile=256))
    y_large = fwd_bf16(x_large, params_bf16)
    jax.block_until_ready(y_large)
    ref_large = reference_forward(x_large, raw_params)
    assert y_large.shape == (BL, OUT)
    max_err = float(jnp.max(jnp.abs(y_large - ref_large)))
    assert jnp.allclose(y_large, ref_large, atol=2.5e-1, rtol=2e-1), \
        f"bf16 mismatch vs reference (max abs err {max_err})"

    print("KERNEL_OK")
</pallas_src>

<mosaic_0001>
module attributes {stable_mosaic.version = 11 : i64} {
  func.func @mlp_kernel(%arg0: memref<8x32xf32, #tpu.memory_space<vmem>>, %arg1: memref<32x128xf32, #tpu.memory_space<vmem>>, %arg2: memref<1x128xf32, #tpu.memory_space<vmem>>, %arg3: memref<128x128xf32, #tpu.memory_space<vmem>>, %arg4: memref<1x128xf32, #tpu.memory_space<vmem>>, %arg5: memref<128x128xf32, #tpu.memory_space<vmem>>, %arg6: memref<1x128xf32, #tpu.memory_space<vmem>>, %arg7: memref<128x8xf32, #tpu.memory_space<vmem>>, %arg8: memref<1x8xf32, #tpu.memory_space<vmem>>, %arg9: memref<8x8xf32, #tpu.memory_space<vmem>>) attributes {dimension_semantics = [], scalar_prefetch = 0 : i64, scratch_operands = 0 : i64, tpu.core_type = #tpu.core_type<tc>} {
    %c0 = arith.constant 0 : index
    %c0_0 = arith.constant 0 : index
    %0 = vector.load %arg0[%c0, %c0_0] : memref<8x32xf32, #tpu.memory_space<vmem>>, vector<8x32xf32>
    %c0_1 = arith.constant 0 : index
    %c0_2 = arith.constant 0 : index
    %1 = vector.load %arg1[%c0_1, %c0_2] : memref<32x128xf32, #tpu.memory_space<vmem>>, vector<32x128xf32>
    %cst = arith.constant dense<0.000000e+00> : vector<8x128xf32>
    %2 = tpu.matmul %0, %1, %cst {dimension_numbers = #tpu.dot_dimension_numbers<[1], [0], [0], [1], [0, 0, 1, 1], [], []>} : vector<8x32xf32>, vector<32x128xf32>, vector<8x128xf32> -> vector<8x128xf32>
    %c0_3 = arith.constant 0 : index
    %c0_4 = arith.constant 0 : index
    %3 = vector.load %arg2[%c0_3, %c0_4] : memref<1x128xf32, #tpu.memory_space<vmem>>, vector<1x128xf32>
    %4 = vector.broadcast %3 : vector<1x128xf32> to vector<8x128xf32>
    %5 = arith.addf %2, %4 : vector<8x128xf32>
    %cst_5 = arith.constant 0.000000e+00 : f32
    %6 = vector.broadcast %cst_5 : f32 to vector<8x128xf32>
    %7 = arith.maximumf %5, %6 : vector<8x128xf32>
    %8 = vector.broadcast %cst_5 : f32 to vector<8x128xf32>
    %9 = arith.subf %5, %8 : vector<8x128xf32>
    %10 = arith.cmpf one, %9, %9 : vector<8x128xf32>
    %11 = vector.broadcast %cst_5 : f32 to vector<8x128xf32>
    %12 = arith.addf %5, %11 : vector<8x128xf32>
    %13 = math.absf %9 : vector<8x128xf32>
    %cst_6 = arith.constant 0.000000e+00 : f32
    %14 = vector.broadcast %cst_6 : f32 to vector<8x128xf32>
    %15 = arith.subf %14, %13 : vector<8x128xf32>
    %16 = math.exp %15 : vector<8x128xf32>
    %17 = math.log1p %16 : vector<8x128xf32>
    %18 = arith.addf %7, %17 : vector<8x128xf32>
    %19 = arith.select %10, %12, %18 : vector<8x128xi1>, vector<8x128xf32>
    %c0_7 = arith.constant 0 : index
    %c0_8 = arith.constant 0 : index
    %20 = vector.load %arg3[%c0_7, %c0_8] : memref<128x128xf32, #tpu.memory_space<vmem>>, vector<128x128xf32>
    %cst_9 = arith.constant dense<0.000000e+00> : vector<8x128xf32>
    %21 = tpu.matmul %19, %20, %cst_9 {dimension_numbers = #tpu.dot_dimension_numbers<[1], [0], [0], [1], [0, 0, 1, 1], [], []>} : vector<8x128xf32>, vector<128x128xf32>, vector<8x128xf32> -> vector<8x128xf32>
    %c0_10 = arith.constant 0 : index
    %c0_11 = arith.constant 0 : index
    %22 = vector.load %arg4[%c0_10, %c0_11] : memref<1x128xf32, #tpu.memory_space<vmem>>, vector<1x128xf32>
    %23 = vector.broadcast %22 : vector<1x128xf32> to vector<8x128xf32>
    %24 = arith.addf %21, %23 : vector<8x128xf32>
    %cst_12 = arith.constant 0.000000e+00 : f32
    %25 = vector.broadcast %cst_12 : f32 to vector<8x128xf32>
    %26 = arith.maximumf %24, %25 : vector<8x128xf32>
    %27 = vector.broadcast %cst_12 : f32 to vector<8x128xf32>
    %28 = arith.subf %24, %27 : vector<8x128xf32>
    %29 = arith.cmpf one, %28, %28 : vector<8x128xf32>
    %30 = vector.broadcast %cst_12 : f32 to vector<8x128xf32>
    %31 = arith.addf %24, %30 : vector<8x128xf32>
    %32 = math.absf %28 : vector<8x128xf32>
    %cst_13 = arith.constant 0.000000e+00 : f32
    %33 = vector.broadcast %cst_13 : f32 to vector<8x128xf32>
    %34 = arith.subf %33, %32 : vector<8x128xf32>
    %35 = math.exp %34 : vector<8x128xf32>
    %36 = math.log1p %35 : vector<8x128xf32>
    %37 = arith.addf %26, %36 : vector<8x128xf32>
    %38 = arith.select %29, %31, %37 : vector<8x128xi1>, vector<8x128xf32>
    %c0_14 = arith.constant 0 : index
    %c0_15 = arith.constant 0 : index
    %39 = vector.load %arg5[%c0_14, %c0_15] : memref<128x128xf32, #tpu.memory_space<vmem>>, vector<128x128xf32>
    %cst_16 = arith.constant dense<0.000000e+00> : vector<8x128xf32>
    %40 = tpu.matmul %38, %39, %cst_16 {dimension_numbers = #tpu.dot_dimension_numbers<[1], [0], [0], [1], [0, 0, 1, 1], [], []>} : vector<8x128xf32>, vector<128x128xf32>, vector<8x128xf32> -> vector<8x128xf32>
    %c0_17 = arith.constant 0 : index
    %c0_18 = arith.constant 0 : index
    %41 = vector.load %arg6[%c0_17, %c0_18] : memref<1x128xf32, #tpu.memory_space<vmem>>, vector<1x128xf32>
    %42 = vector.broadcast %41 : vector<1x128xf32> to vector<8x128xf32>
    %43 = arith.addf %40, %42 : vector<8x128xf32>
    %cst_19 = arith.constant 0.000000e+00 : f32
    %44 = vector.broadcast %cst_19 : f32 to vector<8x128xf32>
    %45 = arith.maximumf %43, %44 : vector<8x128xf32>
    %46 = vector.broadcast %cst_19 : f32 to vector<8x128xf32>
    %47 = arith.subf %43, %46 : vector<8x128xf32>
    %48 = arith.cmpf one, %47, %47 : vector<8x128xf32>
    %49 = vector.broadcast %cst_19 : f32 to vector<8x128xf32>
    %50 = arith.addf %43, %49 : vector<8x128xf32>
    %51 = math.absf %47 : vector<8x128xf32>
    %cst_20 = arith.constant 0.000000e+00 : f32
    %52 = vector.broadcast %cst_20 : f32 to vector<8x128xf32>
    %53 = arith.subf %52, %51 : vector<8x128xf32>
    %54 = math.exp %53 : vector<8x128xf32>
    %55 = math.log1p %54 : vector<8x128xf32>
    %56 = arith.addf %45, %55 : vector<8x128xf32>
    %57 = arith.select %48, %50, %56 : vector<8x128xi1>, vector<8x128xf32>
    %c0_21 = arith.constant 0 : index
    %c0_22 = arith.constant 0 : index
    %58 = vector.load %arg7[%c0_21, %c0_22] : memref<128x8xf32, #tpu.memory_space<vmem>>, vector<128x8xf32>
    %cst_23 = arith.constant dense<0.000000e+00> : vector<8x8xf32>
    %59 = tpu.matmul %57, %58, %cst_23 {dimension_numbers = #tpu.dot_dimension_numbers<[1], [0], [0], [1], [0, 0, 1, 1], [], []>} : vector<8x128xf32>, vector<128x8xf32>, vector<8x8xf32> -> vector<8x8xf32>
    %c0_24 = arith.constant 0 : index
    %c0_25 = arith.constant 0 : index
    %60 = vector.load %arg8[%c0_24, %c0_25] : memref<1x8xf32, #tpu.memory_space<vmem>>, vector<1x8xf32>
    %61 = vector.broadcast %60 : vector<1x8xf32> to vector<8x8xf32>
    %62 = arith.addf %59, %61 : vector<8x8xf32>
    %c0_26 = arith.constant 0 : index
    %c0_27 = arith.constant 0 : index
    %63 = vector.load %arg9[%c0_26, %c0_27] : memref<8x8xf32, #tpu.memory_space<vmem>>, vector<8x8xf32>
    tpu.vector_store %arg9[%c0_26, %c0_27], %62 {strides = array<i32>} : memref<8x8xf32, #tpu.memory_space<vmem>>, vector<8x8xf32>,
    return
  }
}

</mosaic_0001>

<llo_original>
// kernel: policy_net_forward.1
$region0: #{policy_net_forward.1}
  #allocation0 [shape = 'u32[]', space=smem, size = 0x4, offset = 0x4, fixed_abs, tag = 'smem constant byte address 0x4 - core index']
  #allocation1 [shape = 'u32[144,128]{1,0:T(1,128)}', space=vmem, size = 0x12000, scoped, tag = 'internal scratch']
  %s0 = inlined_call_operand.vmem [shape: f32[8,32], index: 0, kind: input, shape index: {}]
  %s1 = inlined_call_operand.hbm [shape: f32[32,128], index: 1, kind: input, shape index: {}]
  %s2 = inlined_call_operand.vmem [shape: f32[1,128], index: 2, kind: input, shape index: {}]
  %s3 = inlined_call_operand.vmem [shape: f32[128,128], index: 3, kind: input, shape index: {}]
  %s4 = inlined_call_operand.vmem [shape: f32[1,128], index: 4, kind: input, shape index: {}]
  %s5 = inlined_call_operand.hbm [shape: f32[128,128], index: 5, kind: input, shape index: {}]
  %s6 = inlined_call_operand.vmem [shape: f32[1,128], index: 6, kind: input, shape index: {}]
  %s7 = inlined_call_operand.vmem [shape: f32[128,8], index: 7, kind: input, shape index: {}]
  %s8 = inlined_call_operand.vmem [shape: f32[1,8], index: 8, kind: input, shape index: {}]
  %s9 = inlined_call_operand.hbm [shape: f32[8,8], index: 9, kind: output, shape index: {}]
  %s10 = sld [smem:[#allocation0]]
  $region54: #{policy_net_forward.1} parent=0
    _
  %s12 = ssub.s32 1, %s10
  %s13 = scalar_select 0, %s12, %s10
  $region1: #{policy_net_forward.1} parent=0
    #allocation2 [shape = 'u8[16384]{0}', space=vmem, size = 0x4000, scoped, tag = 'input window, operand 1, single buffered']
    #allocation3 [shape = 's32[1]{0}', space=sflag, size = 0x4, scoped, tag = 'scoped memory for policy_net_forward.1']
    #allocation4 [shape = 's32[1]{0}', space=sflag, size = 0x4, scoped, tag = 'scoped memory for policy_net_forward.1']
    #allocation5 [shape = 'u8[65536]{0}', space=vmem, size = 0x10000, scoped, tag = 'input window, operand 5, single buffered']
    #allocation6 [shape = 's32[1]{0}', space=sflag, size = 0x4, scoped, tag = 'scoped memory for policy_net_forward.1']
    #allocation7 [shape = 'u8[4096]{0}', space=vmem, size = 0x1000, scoped, tag = 'output window, operand 0, single buffered']
    %14 = vsyncpa [#allocation3], 0
    %15 = vsyncpa [#allocation6], 0
    %16 = vsyncpa [#allocation4], 0
    // Predicated region
    $region2: #{policy_net_forward.1} parent=1 // pred_check
      _
    $region3: #{policy_net_forward.1} parent=1 // pred_check_branch
      %18 = sbr.rel (0) target = $region5
    $region4: #{policy_net_forward.1} parent=1 // pred_region
      _
    $region5: #{policy_net_forward.1} parent=1 // pred_fallthru
      _
    // Predicated region
    $region6: #{policy_net_forward.1} parent=1 // pred_check
      _
    $region7: #{policy_net_forward.1} parent=1 // pred_check_branch
      %20 = sbr.rel (0) target = $region9
    $region8: #{policy_net_forward.1} parent=1 // pred_region
      %s22 = ssub.s32 512, 512
      %23 = vsyncadd [#allocation3], %s22
      %s24 = sshll.u32 [#allocation2], 4
      %s25 = int_to_ptr.vmem [resolvable:$true] %s24
      %30 = dma.hbm_to_vmem [thread:$0]  %s1, 512, %s25, [#allocation3], 128, 128, 8
    $region9: #{policy_net_forward.1} parent=1 // pred_fallthru
      _
    // Predicated region
    $region10: #{policy_net_forward.1} parent=1 // pred_check
      _
    $region11: #{policy_net_forward.1} parent=1 // pred_check_branch
      %32 = sbr.rel (0) target = $region13
    $region12: #{policy_net_forward.1} parent=1 // pred_region
      _
    $region13: #{policy_net_forward.1} parent=1 // pred_fallthru
      _
    // Predicated region
    $region14: #{policy_net_forward.1} parent=1 // pred_check
      _
    $region15: #{policy_net_forward.1} parent=1 // pred_check_branch
      %34 = sbr.rel (0) target = $region17
    $region16: #{policy_net_forward.1} parent=1 // pred_region
      _
    $region17: #{policy_net_forward.1} parent=1 // pred_fallthru
      _
    // Predicated region
    $region18: #{policy_net_forward.1} parent=1 // pred_check
      _
    $region19: #{policy_net_forward.1} parent=1 // pred_check_branch
      %36 = sbr.rel (0) target = $region21
    $region20: #{policy_net_forward.1} parent=1 // pred_region
      _
    $region21: #{policy_net_forward.1} parent=1 // pred_fallthru
      _
    // Predicated region
    $region22: #{policy_net_forward.1} parent=1 // pred_check
      _
    $region23: #{policy_net_forward.1} parent=1 // pred_check_branch
      %38 = sbr.rel (0) target = $region25
    $region24: #{policy_net_forward.1} parent=1 // pred_region
      %s40 = ssub.s32 2048, 2048
      %41 = vsyncadd [#allocation6], %s40
      %s42 = sshll.u32 [#allocation5], 4
      %s43 = int_to_ptr.vmem [resolvable:$true] %s42
      %48 = dma.hbm_to_vmem [thread:$0]  %s5, 2048, %s43, [#allocation6], 128, 128, 8
    $region25: #{policy_net_forward.1} parent=1 // pred_fallthru
      _
    // Predicated region
    $region26: #{policy_net_forward.1} parent=1 // pred_check
      _
    $region27: #{policy_net_forward.1} parent=1 // pred_check_branch
      %50 = sbr.rel (0) target = $region29
    $region28: #{policy_net_forward.1} parent=1 // pred_region
      _
    $region29: #{policy_net_forward.1} parent=1 // pred_fallthru
      _
    // Predicated region
    $region30: #{policy_net_forward.1} parent=1 // pred_check
      _
    $region31: #{policy_net_forward.1} parent=1 // pred_check_branch
      %52 = sbr.rel (0) target = $region33
    $region32: #{policy_net_forward.1} parent=1 // pred_region
      _
    $region33: #{policy_net_forward.1} parent=1 // pred_fallthru
      _
    // Predicated region
    $region34: #{policy_net_forward.1} parent=1 // pred_check
      _
    $region35: #{policy_net_forward.1} parent=1 // pred_check_branch
      %54 = sbr.rel (0) target = $region37
    $region36: #{policy_net_forward.1} parent=1 // pred_region
      _
    $region37: #{policy_net_forward.1} parent=1 // pred_fallthru
      _
    // Predicated region
    $region38: #{policy_net_forward.1} parent=1 // pred_check
      _
    $region39: #{policy_net_forward.1} parent=1 // pred_check_branch
      %56 = sbr.rel (0) target = $region41
    $region40: #{policy_net_forward.1} parent=1 // pred_region
      %57 = dma.done [#allocation3], 512
    $region41: #{policy_net_forward.1} parent=1 // pred_fallthru
      _
    // Predicated region
    $region42: #{policy_net_forward.1} parent=1 // pred_check
      _
    $region43: #{policy_net_forward.1} parent=1 // pred_check_branch
      %59 = sbr.rel (0) target = $region45
    $region44: #{policy_net_forward.1} parent=1 // pred_region
      %60 = dma.done [#allocation6], 2048
    $region45: #{policy_net_forward.1} parent=1 // pred_fallthru
      _
    %v61 = vld [vmem:[%s0] sm:$0xff]
    %v62 = vld [vmem:[#allocation2] sm:$0xff]
    %v63 = vld [vmem:[#allocation2 + $0x8] sm:$0xff]
    %v64 = vld [vmem:[#allocation2 + $0x10] sm:$0xff]
    %v65 = vld [vmem:[#allocation2 + $0x18] sm:$0xff]
    %v66 = vld [vmem:[%s2] sm:$0x1]
    %v68 = vlaneseq
    %v69 = vshrl.u32 %v68, 7
    %v70 = vsub.s32 0, %v69
    %v71 = vrot.slane %v66, %v70
    %vm73 = vcmask 261120
    %v75 = vsel %vm73, %v61, 0
    %77 = vmatprep.subr.mxu0 0.0
    %78 = vmatpush1.msra.mxu0 %v62
    %79 = vmatprep.subr.mxu0 0.0
    %80 = vmatpush1.msra.mxu0 %v63
    %81 = vmatprep.subr.mxu0 0.0
    %82 = vmatpush1.msra.mxu0 %v64
    %83 = vmatprep.subr.mxu0 0.0
    %84 = vmatpush1.msra.mxu0 %v65
    %85 = vmatprep.subr.mxu0 0.0
    %86 = vmatpush1.msra.mxu0 0.0
    %87 = vmatprep.subr.mxu0 0.0
    %88 = vmatpush1.msra.mxu0 0.0
    %89 = vmatprep.subr.mxu0 0.0
    %90 = vmatpush1.msra.mxu0 0.0
    %91 = vmatprep.subr.mxu0 0.0
    %92 = vmatpush1.msra.mxu0 0.0
    %93 = vmatprep.subr.mxu0 0.0
    %94 = vmatpush1.msra.mxu0 0.0
    %95 = vmatprep.subr.mxu0 0.0
    %96 = vmatpush1.msra.mxu0 0.0
    %97 = vmatprep.subr.mxu0 0.0
    %98 = vmatpush1.msra.mxu0 0.0
    %99 = vmatprep.subr.mxu0 0.0
    %100 = vmatpush1.msra.mxu0 0.0
    %101 = vmatprep.subr.mxu0 0.0
    %102 = vmatpush1.msra.mxu0 0.0
    %103 = vmatprep.subr.mxu0 0.0
    %104 = vmatpush1.msra.mxu0 0.0
    %105 = vmatprep.subr.mxu0 0.0
    %106 = vmatpush1.msra.mxu0 0.0
    %107 = vmatprep.subr.mxu0 0.0
    %108 = vmatpush1.msra.mxu0 0.0
    %109 = vmatprep.subr.mxu0 0.0
    %110 = vmatpush1.msra.mxu0 0.0
    %111 = vmatprep.subr.mxu0 0.0
    %112 = vmatpush1.msra.mxu0 0.0
    %113 = vmatprep.subr.mxu0 0.0
    %114 = vmatpush1.msra.mxu0 0.0
    %115 = vmatprep.subr.mxu0 0.0
    %116 = vmatpush1.msra.mxu0 0.0
    %117 = vmatprep.subr.mxu0 0.0
    %118 = vmatpush1.msra.mxu0 0.0
    %119 = vmatprep.subr.mxu0 0.0
    %120 = vmatpush1.msra.mxu0 0.0
    %121 = vmatprep.subr.mxu0 0.0
    %122 = vmatpush1.msra.mxu0 0.0
    %123 = vmatprep.subr.mxu0 0.0
    %124 = vmatpush1.msra.mxu0 0.0
    %125 = vmatprep.subr.mxu0 0.0
    %126 = vmatpush1.msra.mxu0 0.0
    %127 = vmatprep.subr.mxu0 0.0
    %128 = vmatpush1.msra.mxu0 0.0
    %129 = vmatprep.subr.mxu0 0.0
    %130 = vmatpush1.msra.mxu0 0.0
    %131 = vmatprep.subr.mxu0 0.0
    %132 = vmatpush1.msra.mxu0 0.0
    %133 = vmatprep.subr.mxu0 0.0
    %134 = vmatpush1.msra.mxu0 0.0
    %135 = vmatprep.subr.mxu0 0.0
    %136 = vmatpush1.msra.mxu0 0.0
    %137 = vmatprep.subr.mxu0 0.0
    %138 = vmatpush1.msra.mxu0 0.0
    %139 = vmatprep.subr.mxu0 0.0
    %140 = vmatpush1.msra.mxu0 0.0
    %141 = vmatprep.mubr.f32.mxu0 0.0
    %142 = vmatmul.mubr.f32.gmra.mrb[0].mxu0 %v75
    %v143 = vpop.f32.mrb[0].mxu0
    %v144 = vadd.f32 %v71, %v143
    %v145 = vpop.f32.mrb[0].mxu0
    %146 = vdwg.mxu0
    %v147 = vmax.f32 %v144, 0.0
    %vm148 = vcmp.ne.f32.partialorder %v144, %v144
    %v149 = vadd.f32 %v144, 0.0
    %v150 = vand.u32 2147483647, %v144
    %v151 = vsub.f32 0.0, %v150
    %v152 = vmul.f32 %v151, 1.442695
    %v153 = vpow.pop %v152
    %v154 = vadd.f32 %v153, 1.0
    %v155 = vlog2.pop %v154
    %v156 = vmul.f32 %v155, 0.6931472
    %v157 = vmul.f32 -0.5, %v153
    %v158 = vadd.f32 %v157, 1.0
    %v159 = vmul.f32 %v158, %v153
    %v160 = vand.u32 2147483647, %v153
    %vm161 = vcmp.lt.f32.partialorder %v160, 0.0004427343
    %v162 = vsel %vm161, %v159, %v156
    %v163 = vadd.f32 %v147, %v162
    %v164 = vsel %vm148, %v149, %v163
    %v165 = vld [vmem:[%s3] sm:$0xff]
    %v166 = vld [vmem:[%s3 + $0x8] sm:$0xff]
    %v167 = vld [vmem:[%s3 + $0x10] sm:$0xff]
    %v168 = vld [vmem:[%s3 + $0x18] sm:$0xff]
    %v169 = vld [vmem:[%s3 + $0x20] sm:$0xff]
    %v170 = vld [vmem:[%s3 + $0x28] sm:$0xff]
    %v171 = vld [vmem:[%s3 + $0x30] sm:$0xff]
    %v172 = vld [vmem:[%s3 + $0x38] sm:$0xff]
    %v173 = vld [vmem:[%s3 + $0x40] sm:$0xff]
    %v174 = vld [vmem:[%s3 + $0x48] sm:$0xff]
    %v175 = vld [vmem:[%s3 + $0x50] sm:$0xff]
    %v176 = vld [vmem:[%s3 + $0x58] sm:$0xff]
    %v177 = vld [vmem:[%s3 + $0x60] sm:$0xff]
    %v178 = vld [vmem:[%s3 + $0x68] sm:$0xff]
    %v179 = vld [vmem:[%s3 + $0x70] sm:$0xff]
    %v180 = vld [vmem:[%s3 + $0x78] sm:$0xff]
    %v181 = vld [vmem:[%s4] sm:$0x1]
    %v183 = vlaneseq
    %v184 = vshrl.u32 %v183, 7
    %v185 = vsub.s32 0, %v184
    %v186 = vrot.slane %v181, %v185
    %188 = vmatprep.subr.mxu0 0.0
    %189 = vmatpush1.msra.mxu0 %v165
    %190 = vmatprep.subr.mxu0 0.0
    %191 = vmatpush1.msra.mxu0 %v166
    %192 = vmatprep.subr.mxu0 0.0
    %193 = vmatpush1.msra.mxu0 %v167
    %194 = vmatprep.subr.mxu0 0.0
    %195 = vmatpush1.msra.mxu0 %v168
    %196 = vmatprep.subr.mxu0 0.0
    %197 = vmatpush1.msra.mxu0 %v169
    %198 = vmatprep.subr.mxu0 0.0
    %199 = vmatpush1.msra.mxu0 %v170
    %200 = vmatprep.subr.mxu0 0.0
    %201 = vmatpush1.msra.mxu0 %v171
    %202 = vmatprep.subr.mxu0 0.0
    %203 = vmatpush1.msra.mxu0 %v172
    %204 = vmatprep.subr.mxu0 0.0
    %205 = vmatpush1.msra.mxu0 %v173
    %206 = vmatprep.subr.mxu0 0.0
    %207 = vmatpush1.msra.mxu0 %v174
    %208 = vmatprep.subr.mxu0 0.0
    %209 = vmatpush1.msra.mxu0 %v175
    %210 = vmatprep.subr.mxu0 0.0
    %211 = vmatpush1.msra.mxu0 %v176
    %212 = vmatprep.subr.mxu0 0.0
    %213 = vmatpush1.msra.mxu0 %v177
    %214 = vmatprep.subr.mxu0 0.0
    %215 = vmatpush1.msra.mxu0 %v178
    %216 = vmatprep.subr.mxu0 0.0
    %217 = vmatpush1.msra.mxu0 %v179
    %218 = vmatprep.subr.mxu0 0.0
    %219 = vmatpush1.msra.mxu0 %v180
    %220 = vmatprep.subr.mxu0 0.0
    %221 = vmatpush1.msra.mxu0 0.0
    %222 = vmatprep.subr.mxu0 0.0
    %223 = vmatpush1.msra.mxu0 0.0
    %224 = vmatprep.subr.mxu0 0.0
    %225 = vmatpush1.msra.mxu0 0.0
    %226 = vmatprep.subr.mxu0 0.0
    %227 = vmatpush1.msra.mxu0 0.0
    %228 = vmatprep.subr.mxu0 0.0
    %229 = vmatpush1.msra.mxu0 0.0
    %230 = vmatprep.subr.mxu0 0.0
    %231 = vmatpush1.msra.mxu0 0.0
    %232 = vmatprep.subr.mxu0 0.0
    %233 = vmatpush1.msra.mxu0 0.0
    %234 = vmatprep.subr.mxu0 0.0
    %235 = vmatpush1.msra.mxu0 0.0
    %236 = vmatprep.subr.mxu0 0.0
    %237 = vmatpush1.msra.mxu0 0.0
    %238 = vmatprep.subr.mxu0 0.0
    %239 = vmatpush1.msra.mxu0 0.0
    %240 = vmatprep.subr.mxu0 0.0
    %241 = vmatpush1.msra.mxu0 0.0
    %242 = vmatprep.subr.mxu0 0.0
    %243 = vmatpush1.msra.mxu0 0.0
    %244 = vmatprep.subr.mxu0 0.0
    %245 = vmatpush1.msra.mxu0 0.0
    %246 = vmatprep.subr.mxu0 0.0
    %247 = vmatpush1.msra.mxu0 0.0
    %248 = vmatprep.subr.mxu0 0.0
    %249 = vmatpush1.msra.mxu0 0.0
    %250 = vmatprep.subr.mxu0 0.0
    %251 = vmatpush1.msra.mxu0 0.0
    %252 = vmatprep.mubr.f32.mxu0 0.0
    %253 = vmatmul.mubr.f32.gmra.mrb[0].mxu0 %v164
    %v254 = vpop.f32.mrb[0].mxu0
    %v255 = vadd.f32 %v186, %v254
    %v256 = vpop.f32.mrb[0].mxu0
    %257 = vdwg.mxu0
    %v258 = vmax.f32 %v255, 0.0
    %vm259 = vcmp.ne.f32.partialorder %v255, %v255
    %v260 = vadd.f32 %v255, 0.0
    %v261 = vand.u32 2147483647, %v255
    %v262 = vsub.f32 0.0, %v261
    %v263 = vmul.f32 %v262, 1.442695
    %v264 = vpow.pop %v263
    %v265 = vadd.f32 %v264, 1.0
    %v266 = vlog2.pop %v265
    %v267 = vmul.f32 %v266, 0.6931472
    %v268 = vmul.f32 -0.5, %v264
    %v269 = vadd.f32 %v268, 1.0
    %v270 = vmul.f32 %v269, %v264
    %v271 = vand.u32 2147483647, %v264
    %vm272 = vcmp.lt.f32.partialorder %v271, 0.0004427343
    %v273 = vsel %vm272, %v270, %v267
    %v274 = vadd.f32 %v258, %v273
    %v275 = vsel %vm259, %v260, %v274
    %v276 = vld [vmem:[#allocation5] sm:$0xff]
    %v277 = vld [vmem:[#allocation5 + $0x8] sm:$0xff]
    %v278 = vld [vmem:[#allocation5 + $0x10] sm:$0xff]
    %v279 = vld [vmem:[#allocation5 + $0x18] sm:$0xff]
    %v280 = vld [vmem:[#allocation5 + $0x20] sm:$0xff]
    %v281 = vld [vmem:[#allocation5 + $0x28] sm:$0xff]
    %v282 = vld [vmem:[#allocation5 + $0x30] sm:$0xff]
    %v283 = vld [vmem:[#allocation5 + $0x38] sm:$0xff]
    %v284 = vld [vmem:[#allocation5 + $0x40] sm:$0xff]
    %v285 = vld [vmem:[#allocation5 + $0x48] sm:$0xff]
    %v286 = vld [vmem:[#allocation5 + $0x50] sm:$0xff]
    %v287 = vld [vmem:[#allocation5 + $0x58] sm:$0xff]
    %v288 = vld [vmem:[#allocation5 + $0x60] sm:$0xff]
    %v289 = vld [vmem:[#allocation5 + $0x68] sm:$0xff]
    %v290 = vld [vmem:[#allocation5 + $0x70] sm:$0xff]
    %v291 = vld [vmem:[#allocation5 + $0x78] sm:$0xff]
    %v292 = vld [vmem:[%s6] sm:$0x1]
    %v294 = vlaneseq
    %v295 = vshrl.u32 %v294, 7
    %v296 = vsub.s32 0, %v295
    %v297 = vrot.slane %v292, %v296
    %299 = vmatprep.subr.mxu0 0.0
    %300 = vmatpush1.msra.mxu0 %v276
    %301 = vmatprep.subr.mxu0 0.0
    %302 = vmatpush1.msra.mxu0 %v277
    %303 = vmatprep.subr.mxu0 0.0
    %304 = vmatpush1.msra.mxu0 %v278
    %305 = vmatprep.subr.mxu0 0.0
    %306 = vmatpush1.msra.mxu0 %v279
    %307 = vmatprep.subr.mxu0 0.0
    %308 = vmatpush1.msra.mxu0 %v280
    %309 = vmatprep.subr.mxu0 0.0
    %310 = vmatpush1.msra.mxu0 %v281
    %311 = vmatprep.subr.mxu0 0.0
    %312 = vmatpush1.msra.mxu0 %v282
    %313 = vmatprep.subr.mxu0 0.0
    %314 = vmatpush1.msra.mxu0 %v283
    %315 = vmatprep.subr.mxu0 0.0
    %316 = vmatpush1.msra.mxu0 %v284
    %317 = vmatprep.subr.mxu0 0.0
    %318 = vmatpush1.msra.mxu0 %v285
    %319 = vmatprep.subr.mxu0 0.0
    %320 = vmatpush1.msra.mxu0 %v286
    %321 = vmatprep.subr.mxu0 0.0
    %322 = vmatpush1.msra.mxu0 %v287
    %323 = vmatprep.subr.mxu0 0.0
    %324 = vmatpush1.msra.mxu0 %v288
    %325 = vmatprep.subr.mxu0 0.0
    %326 = vmatpush1.msra.mxu0 %v289
    %327 = vmatprep.subr.mxu0 0.0
    %328 = vmatpush1.msra.mxu0 %v290
    %329 = vmatprep.subr.mxu0 0.0
    %330 = vmatpush1.msra.mxu0 %v291
    %331 = vmatprep.subr.mxu0 0.0
    %332 = vmatpush1.msra.mxu0 0.0
    %333 = vmatprep.subr.mxu0 0.0
    %334 = vmatpush1.msra.mxu0 0.0
    %335 = vmatprep.subr.mxu0 0.0
    %336 = vmatpush1.msra.mxu0 0.0
    %337 = vmatprep.subr.mxu0 0.0
    %338 = vmatpush1.msra.mxu0 0.0
    %339 = vmatprep.subr.mxu0 0.0
    %340 = vmatpush1.msra.mxu0 0.0
    %341 = vmatprep.subr.mxu0 0.0
    %342 = vmatpush1.msra.mxu0 0.0
    %343 = vmatprep.subr.mxu0 0.0
    %344 = vmatpush1.msra.mxu0 0.0
    %345 = vmatprep.subr.mxu0 0.0
    %346 = vmatpush1.msra.mxu0 0.0
    %347 = vmatprep.subr.mxu0 0.0
    %348 = vmatpush1.msra.mxu0 0.0
    %349 = vmatprep.subr.mxu0 0.0
    %350 = vmatpush1.msra.mxu0 0.0
    %351 = vmatprep.subr.mxu0 0.0
    %352 = vmatpush1.msra.mxu0 0.0
    %353 = vmatprep.subr.mxu0 0.0
    %354 = vmatpush1.msra.mxu0 0.0
    %355 = vmatprep.subr.mxu0 0.0
    %356 = vmatpush1.msra.mxu0 0.0
    %357 = vmatprep.subr.mxu0 0.0
    %358 = vmatpush1.msra.mxu0 0.0
    %359 = vmatprep.subr.mxu0 0.0
    %360 = vmatpush1.msra.mxu0 0.0
    %361 = vmatprep.subr.mxu0 0.0
    %362 = vmatpush1.msra.mxu0 0.0
    %363 = vmatprep.mubr.f32.mxu0 0.0
    %364 = vmatmul.mubr.f32.gmra.mrb[0].mxu0 %v275
    %v365 = vpop.f32.mrb[0].mxu0
    %v366 = vadd.f32 %v297, %v365
    %v367 = vpop.f32.mrb[0].mxu0
    %368 = vdwg.mxu0
    %v369 = vmax.f32 %v366, 0.0
    %vm370 = vcmp.ne.f32.partialorder %v366, %v366
    %v371 = vadd.f32 %v366, 0.0
    %v372 = vand.u32 2147483647, %v366
    %v373 = vsub.f32 0.0, %v372
    %v374 = vmul.f32 %v373, 1.442695
    %v375 = vpow.pop %v374
    %v376 = vadd.f32 %v375, 1.0
    %v377 = vlog2.pop %v376
    %v378 = vmul.f32 %v377, 0.6931472
    %v379 = vmul.f32 -0.5, %v375
    %v380 = vadd.f32 %v379, 1.0
    %v381 = vmul.f32 %v380, %v375
    %v382 = vand.u32 2147483647, %v375
    %vm383 = vcmp.lt.f32.partialorder %v382, 0.0004427343
    %v384 = vsel %vm383, %v381, %v378
    %v385 = vadd.f32 %v369, %v384
    %v386 = vsel %vm370, %v371, %v385
    %v387 = vld [vmem:[%s7] sm:$0xff]
    %v388 = vld [vmem:[%s7 + $0x8] sm:$0xff]
    %v389 = vld [vmem:[%s7 + $0x10] sm:$0xff]
    %v390 = vld [vmem:[%s7 + $0x18] sm:$0xff]
    %v391 = vld [vmem:[%s7 + $0x20] sm:$0xff]
    %v392 = vld [vmem:[%s7 + $0x28] sm:$0xff]
    %v393 = vld [vmem:[%s7 + $0x30] sm:$0xff]
    %v394 = vld [vmem:[%s7 + $0x38] sm:$0xff]
    %v395 = vld [vmem:[%s7 + $0x40] sm:$0xff]
    %v396 = vld [vmem:[%s7 + $0x48] sm:$0xff]
    %v397 = vld [vmem:[%s7 + $0x50] sm:$0xff]
    %v398 = vld [vmem:[%s7 + $0x58] sm:$0xff]
    %v399 = vld [vmem:[%s7 + $0x60] sm:$0xff]
    %v400 = vld [vmem:[%s7 + $0x68] sm:$0xff]
    %v401 = vld [vmem:[%s7 + $0x70] sm:$0xff]
    %v402 = vld [vmem:[%s7 + $0x78] sm:$0xff]
    %v403 = vld [vmem:[%s8] sm:$0x1]
    %v405 = vlaneseq
    %v406 = vshrl.u32 %v405, 7
    %v407 = vsub.s32 0, %v406
    %v408 = vrot.slane %v403, %v407
    %410 = vmatprep.subr.mxu0 0.0
    %411 = vmatpush1.msra.mxu0 %v387
    %412 = vmatprep.subr.mxu0 0.0
    %413 = vmatpush1.msra.mxu0 %v388
    %414 = vmatprep.subr.mxu0 0.0
    %415 = vmatpush1.msra.mxu0 %v389
    %416 = vmatprep.subr.mxu0 0.0
    %417 = vmatpush1.msra.mxu0 %v390
    %418 = vmatprep.subr.mxu0 0.0
    %419 = vmatpush1.msra.mxu0 %v391
    %420 = vmatprep.subr.mxu0 0.0
    %421 = vmatpush1.msra.mxu0 %v392
    %422 = vmatprep.subr.mxu0 0.0
    %423 = vmatpush1.msra.mxu0 %v393
    %424 = vmatprep.subr.mxu0 0.0
    %425 = vmatpush1.msra.mxu0 %v394
    %426 = vmatprep.subr.mxu0 0.0
    %427 = vmatpush1.msra.mxu0 %v395
    %428 = vmatprep.subr.mxu0 0.0
    %429 = vmatpush1.msra.mxu0 %v396
    %430 = vmatprep.subr.mxu0 0.0
    %431 = vmatpush1.msra.mxu0 %v397
    %432 = vmatprep.subr.mxu0 0.0
    %433 = vmatpush1.msra.mxu0 %v398
    %434 = vmatprep.subr.mxu0 0.0
    %435 = vmatpush1.msra.mxu0 %v399
    %436 = vmatprep.subr.mxu0 0.0
    %437 = vmatpush1.msra.mxu0 %v400
    %438 = vmatprep.subr.mxu0 0.0
    %439 = vmatpush1.msra.mxu0 %v401
    %440 = vmatprep.subr.mxu0 0.0
    %441 = vmatpush1.msra.mxu0 %v402
    %442 = vmatprep.subr.mxu0 0.0
    %443 = vmatpush1.msra.mxu0 0.0
    %444 = vmatprep.subr.mxu0 0.0
    %445 = vmatpush1.msra.mxu0 0.0
    %446 = vmatprep.subr.mxu0 0.0
    %447 = vmatpush1.msra.mxu0 0.0
    %448 = vmatprep.subr.mxu0 0.0
    %449 = vmatpush1.msra.mxu0 0.0
    %450 = vmatprep.subr.mxu0 0.0
    %451 = vmatpush1.msra.mxu0 0.0
    %452 = vmatprep.subr.mxu0 0.0
    %453 = vmatpush1.msra.mxu0 0.0
    %454 = vmatprep.subr.mxu0 0.0
    %455 = vmatpush1.msra.mxu0 0.0
    %456 = vmatprep.subr.mxu0 0.0
    %457 = vmatpush1.msra.mxu0 0.0
    %458 = vmatprep.subr.mxu0 0.0
    %459 = vmatpush1.msra.mxu0 0.0
    %460 = vmatprep.subr.mxu0 0.0
    %461 = vmatpush1.msra.mxu0 0.0
    %462 = vmatprep.subr.mxu0 0.0
    %463 = vmatpush1.msra.mxu0 0.0
    %464 = vmatprep.subr.mxu0 0.0
    %465 = vmatpush1.msra.mxu0 0.0
    %466 = vmatprep.subr.mxu0 0.0
    %467 = vmatpush1.msra.mxu0 0.0
    %468 = vmatprep.subr.mxu0 0.0
    %469 = vmatpush1.msra.mxu0 0.0
    %470 = vmatprep.subr.mxu0 0.0
    %471 = vmatpush1.msra.mxu0 0.0
    %472 = vmatprep.subr.mxu0 0.0
    %473 = vmatpush1.msra.mxu0 0.0
    %474 = vmatprep.mubr.f32.mxu0 0.0
    %475 = vmatmul.mubr.f32.gmra.mrb[0].mxu0 %v386
    %v476 = vpop.f32.mrb[0].mxu0
    %v477 = vadd.f32 %v408, %v476
    %v478 = vpop.f32.mrb[0].mxu0
    %479 = vdwg.mxu0
    %vm480 = vcmask 64512
    %481 = vst.msk [vmem:[#allocation7] sm:$0xff] %vm480, %v477
    // Predicated region
    $region46: #{policy_net_forward.1} parent=1 // pred_check
      _
    $region47: #{policy_net_forward.1} parent=1 // pred_check_branch
      %483 = sbr.rel (0) target = $region49
    $region48: #{policy_net_forward.1} parent=1 // pred_region
      %s485 = ssub.s32 128, 128
      %486 = vsyncadd [#allocation4], %s485
      %s488 = sshll.u32 [#allocation7], 4
      %s489 = int_to_ptr.vmem [resolvable:$true] %s488
      %491 = dma.vmem_to_hbm [thread:$0]  %s489, 128, %s9, [#allocation4]
    $region49: #{policy_net_forward.1} parent=1 // pred_fallthru
      _
    // Predicated region
    $region50: #{policy_net_forward.1} parent=1 // pred_check
      _
    $region51: #{policy_net_forward.1} parent=1 // pred_check_branch
      %493 = sbr.rel (0) target = $region53
    $region52: #{policy_net_forward.1} parent=1 // pred_region
      %494 = dma.done [#allocation4], 128
    $region53: #{policy_net_forward.1} parent=1 // pred_fallthru
      _
    %495 = vsyncpa [#allocation3], 1
    %496 = vsyncpa [#allocation6], 1
    %497 = vsyncpa [#allocation4], 1

</llo_original>
